<compile_context>
chip_gen: v6e
topology: v6e:2x2x1
jax: 0.10.0
libtpu: 0.0.40
codegen_flags: <defaults>
</compile_context>

<pallas_src>
import math

import jax
import jax.numpy as jnp
from jax import lax
from jax.experimental import pallas as pl
from jax.experimental.pallas import tpu as pltpu

LN_EPS = 1e-5  # torch.nn.LayerNorm default


def _patch_merge_kernel(x_ref, w_ref, gb_ref, o_ref, xt_ref, xb_ref):
    """One grid step = th output rows x Wo output cols of one image.

    x_ref : (2*th, Wo, 2C)   two input rows per output row (even=top, odd=bottom)
    w_ref : (2, 2C, D)       [W_top; W_bot] re-packed reduction weight (resident)
    gb_ref: (2, D)           stacked LayerNorm gamma / beta, f32 (resident)
    o_ref : (th, Wo, D)
    xt/xb : (th*wo_grp, 2C)  VMEM scratch: flattened top / bottom halves of tokens
    """
    n_rows, wo, _ = o_ref.shape
    c2 = xt_ref.shape[1]
    wo_grp = xt_ref.shape[0] // n_rows   # sublane-tile-aligned row-group stride
    pad = wo_grp - wo

    # ---- fused 2x2 gather: flatten patches into token-major scratch --------
    # Input row 2r holds [x0 | x2] for every token of output row r, row 2r+1
    # holds [x1 | x3] (Swin-V2 concat order is [x0, x1, x2, x3]).
    if pad:
        pad_zero = jnp.zeros((pad, c2), dtype=xt_ref.dtype)  # hoisted constant
    for r in range(n_rows):
        dst = pl.ds(r * wo_grp, wo)           # group offsets are tile-aligned
        xt_ref[dst, :] = x_ref[2 * r]
        xb_ref[dst, :] = x_ref[2 * r + 1]
        if pad:
            # Keep pad rows deterministic; their outputs are never stored.
            xt_ref[pl.ds(r * wo_grp + wo, pad), :] = pad_zero
            xb_ref[pl.ds(r * wo_grp + wo, pad), :] = pad_zero

    # ---- reduction: Linear(4C -> D, bias=False), f32 MXU accumulation ------
    y = jnp.dot(xt_ref[...], w_ref[0], preferred_element_type=jnp.float32)
    y = y + jnp.dot(xb_ref[...], w_ref[1], preferred_element_type=jnp.float32)

    # ---- LayerNorm over out_dim (all statistics in f32) ---------------------
    mean = jnp.mean(y, axis=-1, keepdims=True)
    cen = y - mean
    var = jnp.mean(cen * cen, axis=-1, keepdims=True)
    y = cen * lax.rsqrt(var + LN_EPS)
    y = (y * gb_ref[0:1, :] + gb_ref[1:2, :]).astype(o_ref.dtype)

    # ---- direct per-row store into the (th, Wo, D) output block ------------
    # (no staging scratch; slice starts r*wo_grp are sublane-tile aligned)
    for r in range(n_rows):
        o_ref[r] = y[r * wo_grp:r * wo_grp + wo]


def pack_patch_merging_params(w_reduction, ln_gamma, ln_beta, dtype=None):
    """Re-pack the torch parameters ONCE at load time (hoisted out of forward).

    Args:
      w_reduction: (4*C, out_dim) = torch `reduction.weight.T`
                   (nn.Linear stores (out_dim, 4*C)).
      ln_gamma, ln_beta: (out_dim,) LayerNorm affine params.
      dtype: compute dtype for the weight (should match the activation dtype).
    Returns:
      w_stk: (2, 2C, D) stacked [W_top; W_bot] matching the [x0|x2]/[x1|x3]
             row layout of the fused gather.
      gb:    (2, D) float32 stacked (gamma, beta).
    """
    K, D = w_reduction.shape
    assert K % 4 == 0, K
    C = K // 4
    if dtype is not None:
        w_reduction = w_reduction.astype(dtype)
    # Row index of w_reduction is k = w_parity*2C + h_parity*C + c.
    w = w_reduction.reshape(2, 2, C, D)            # (w_par, h_par, c, D)
    w_top = w[:, 0].reshape(2 * C, D)              # rows for x0 then x2
    w_bot = w[:, 1].reshape(2 * C, D)              # rows for x1 then x3
    w_stk = jnp.stack([w_top, w_bot])              # (2, 2C, D)
    gb = jnp.stack([ln_gamma, ln_beta]).astype(jnp.float32)   # (2, D)
    return w_stk, gb


def patch_merging(x, w_stk, gb, *, token_tile=1024,
                  vmem_budget_bytes=40 * 1024 * 1024, vmem_limit_bytes=None):
    """Swin-V2 PatchMerging forward (2x2 merge -> Linear(4C->D) -> LayerNorm).

    Args:
      x:     (B, H, W, C) channels-last input (f32 or bf16).
      w_stk: (2, 2C, D) packed weight from pack_patch_merging_params.
      gb:    (2, D) packed (gamma, beta), f32.
      token_tile: target number of output tokens per grid step (~1K => ~1 MB
                  input slab per step for typical Swin channel counts).
      vmem_budget_bytes: per-step VMEM budget used to shrink the tile (v7x-safe).
    Returns:
      (B, ceil(H/2), ceil(W/2), D) array in x.dtype.
    """
    B, H, W, C = x.shape
    assert w_stk.shape[0] == 2 and w_stk.shape[1] == 2 * C, (w_stk.shape, C)
    D = w_stk.shape[2]
    assert gb.shape == (2, D), gb.shape
    if w_stk.dtype != x.dtype:          # prefer pre-casting in pack_...; tiny if hit
        w_stk = w_stk.astype(x.dtype)

    # F.pad(x, (0, 0, 0, W % 2, 0, H % 2)) -- only materializes when needed.
    if (H % 2) or (W % 2):
        x = jnp.pad(x, ((0, 0), (0, H % 2), (0, W % 2), (0, 0)))
    _, Hp, Wp, _ = x.shape
    Ho, Wo = Hp // 2, Wp // 2
    C2 = 2 * C

    # Free view (pure dim split/merge, no copy): (B, Hp, Wp, C) -> (B, Hp, Wo, 2C).
    # Physical row 2i holds [x0 | x2] and row 2i+1 holds [x1 | x3] per token.
    xv = x.reshape(B, Hp, Wo, C2)

    out_dtype = x.dtype
    itemsize = jnp.dtype(x.dtype).itemsize
    out_itemsize = jnp.dtype(out_dtype).itemsize

    # ---- tile selection ------------------------------------------------------
    # Sublane-tile-aligned row-group stride (8 rows f32, 16 bf16, 32 int8).
    align = 8 * max(1, 4 // itemsize)
    wo_grp = pl.cdiv(Wo, align) * align
    # Token budget only; the hard 128-row cap merely bounds the static unroll
    # of the gather / store loops.
    th = max(1, min(token_tile // wo_grp, Ho, 128))
    if B == 1 and Ho >= 2:
        # Guarantee >= 2 grid steps so both v7x TensorCores get work.
        th = min(th, pl.cdiv(Ho, 2))

    def _vmem_need(t):
        tm_ = t * wo_grp
        return (2 * (2 * t) * Wo * C2 * itemsize      # input block, double-buffered
                + 2 * t * Wo * D * out_itemsize       # output block, double-buffered
                + 2 * 2 * C2 * D * itemsize           # resident weight (2 bufs)
                + 2 * tm_ * C2 * itemsize             # xt / xb gather scratch
                + 3 * tm_ * D * 4)                    # f32 matmul/LN temporaries

    while th > 1 and _vmem_need(th) > vmem_budget_bytes:
        th = max(1, th // 2)
    tm = th * wo_grp

    if vmem_limit_bytes is None:
        # Generous (2x estimate) but capped to stay v7x-physical-safe.
        vmem_limit_bytes = min(max(2 * _vmem_need(th), 32 << 20), 64 << 20)

    n_tokens = B * Ho * Wo
    cost = pl.CostEstimate(
        flops=2 * n_tokens * (4 * C) * D,
        transcendentals=n_tokens,   # one rsqrt per token
        bytes_accessed=(xv.size * itemsize
                        + w_stk.size * itemsize
                        + gb.size * 4
                        + n_tokens * D * out_itemsize),
    )

    out = pl.pallas_call(
        _patch_merge_kernel,
        out_shape=jax.ShapeDtypeStruct((B, Ho, Wo, D), out_dtype),
        grid_spec=pltpu.PrefetchScalarGridSpec(
            num_scalar_prefetch=0,
            grid=(B, pl.cdiv(Ho, th)),   # tail step handled by OOB pad/drop
            in_specs=[
                # One fully contiguous slab of 2*th input rows per step.
                pl.BlockSpec((None, 2 * th, Wo, C2), lambda b, i: (b, i, 0, 0)),
                # Constant index maps -> fetched once, kept resident in VMEM.
                pl.BlockSpec((2, C2, D), lambda b, i: (0, 0, 0)),
                pl.BlockSpec((2, D), lambda b, i: (0, 0)),
            ],
            out_specs=pl.BlockSpec((None, th, Wo, D), lambda b, i: (b, i, 0, 0)),
            scratch_shapes=[
                pltpu.VMEM((tm, C2), x.dtype),   # flattened top-row tokens
                pltpu.VMEM((tm, C2), x.dtype),   # flattened bottom-row tokens
            ],
        ),
        compiler_params=pltpu.CompilerParams(
            dimension_semantics=("parallel", "parallel"),
            vmem_limit_bytes=vmem_limit_bytes,
        ),
        cost_estimate=cost,
    )(xv, w_stk, gb)
    return out


def patch_merging_unpacked(x, w_reduction, ln_gamma, ln_beta, **kw):
    """Convenience wrapper taking torch-layout params (re-packs per call)."""
    w_stk, gb = pack_patch_merging_params(w_reduction, ln_gamma, ln_beta,
                                          dtype=x.dtype)
    return patch_merging(x, w_stk, gb, **kw)


def _reference(x, w_reduction, ln_gamma, ln_beta):
    """Pure-JAX reference mirroring the PyTorch forward (f32 math)."""
    B, H, W, C = x.shape
    if (H % 2) or (W % 2):
        x = jnp.pad(x, ((0, 0), (0, H % 2), (0, W % 2), (0, 0)))
    _, Hp, Wp, _ = x.shape
    x = x.reshape(B, Hp // 2, 2, Wp // 2, 2, C).transpose(0, 1, 3, 4, 2, 5)
    x = x.reshape(B, Hp // 2, Wp // 2, 4 * C)
    y = jnp.einsum("bhwk,kd->bhwd", x, w_reduction,
                   precision=lax.Precision.HIGHEST)
    mean = jnp.mean(y, axis=-1, keepdims=True)
    var = jnp.mean((y - mean) ** 2, axis=-1, keepdims=True)
    y = (y - mean) * lax.rsqrt(var + LN_EPS)
    return y * ln_gamma + ln_beta


if __name__ == "__main__":
    root_key = jax.random.PRNGKey(0)
    apply_fn = jax.jit(patch_merging, static_argnames=("token_tile",))

    def run_case(case_id, B, H, W, C, dtype, tol, **kw):
        D = 2 * C
        k1, k2, k3, k4 = jax.random.split(jax.random.fold_in(root_key, case_id), 4)
        x = jax.random.normal(k1, (B, H, W, C), dtype=jnp.float32)
        w = jax.random.normal(k2, (4 * C, D), dtype=jnp.float32) / math.sqrt(4 * C)
        g = 1.0 + 0.1 * jax.random.normal(k3, (D,), dtype=jnp.float32)
        be = 0.1 * jax.random.normal(k4, (D,), dtype=jnp.float32)

        x_in = x.astype(dtype)
        # Parameter re-pack hoisted out of the forward (done once at load time).
        w_stk, gb = pack_patch_merging_params(w, g, be, dtype=dtype)
        out = apply_fn(x_in, w_stk, gb, **kw)
        out = jax.block_until_ready(out)

        # Reference on the (possibly quantized) inputs, upcast to f32.
        ref = _reference(x_in.astype(jnp.float32),
                         w.astype(dtype).astype(jnp.float32), g, be)
        Ho, Wo = (H + 1) // 2, (W + 1) // 2
        assert out.shape == (B, Ho, Wo, D), out.shape
        assert out.dtype == dtype, out.dtype
        err = float(jnp.max(jnp.abs(out.astype(jnp.float32) - ref)))
        assert err <= tol, (case_id, dtype, err)

    # Lane-dense output (D=128), even spatial dims.
    run_case(1, B=2, H=16, W=16, C=64, dtype=jnp.float32, tol=5e-4)
    # Odd H/W -> exercises the F.pad path and the scratch pad-row zeroing.
    run_case(2, B=2, H=13, W=13, C=16, dtype=jnp.float32, tol=5e-4)
    # bf16 inputs + weights (halved HBM traffic), f32 accumulation / LayerNorm.
    run_case(3, B=2, H=16, W=32, C=64, dtype=jnp.bfloat16, tol=5e-2)
    # B=1 with Ho not divisible by th -> exercises the cdiv tail step (dropped
    # OOB writes) and the >=2-grid-steps cap for v7x dual TensorCores.
    run_case(4, B=1, H=26, W=64, C=64, dtype=jnp.float32, tol=5e-4,
             token_tile=256)

    print("KERNEL_OK")
</pallas_src>

<mosaic_0001>
module attributes {stable_mosaic.version = 11 : i64} {
  func.func @_patch_merge_kernel(%arg0: i32, %arg1: i32, %arg2: memref<1x16x8x128xf32, #tpu.memory_space<vmem>>, %arg3: memref<2x128x128xf32, #tpu.memory_space<vmem>>, %arg4: memref<2x128xf32, #tpu.memory_space<vmem>>, %arg5: memref<1x8x8x128xf32, #tpu.memory_space<vmem>>, %arg6: memref<64x128xf32, #tpu.memory_space<vmem>>, %arg7: memref<64x128xf32, #tpu.memory_space<vmem>>) attributes {dimension_semantics = [#tpu.dimension_semantics<parallel>, #tpu.dimension_semantics<parallel>], iteration_bounds = array<i64: 2, 1>, scalar_prefetch = 0 : i64, scratch_operands = 2 : i64, tpu.core_type = #tpu.core_type<tc>, window_params = [{transform_indices = @transform_0, window_bounds = array<i64: 1, 16, 8, 128>}, {pipeline_mode = #tpu.pipeline_mode<synchronous>, transform_indices = @transform_1, window_bounds = array<i64: 2, 128, 128>}, {pipeline_mode = #tpu.pipeline_mode<synchronous>, transform_indices = @transform_2, window_bounds = array<i64: 2, 128>}, {transform_indices = @transform_3, window_bounds = array<i64: 1, 8, 8, 128>}]} {
    %c0 = arith.constant 0 : index
    %c0_0 = arith.constant 0 : index
    %c0_1 = arith.constant 0 : index
    %c0_2 = arith.constant 0 : index
    %0 = vector.load %arg2[%c0, %c0_0, %c0_1, %c0_2] : memref<1x16x8x128xf32, #tpu.memory_space<vmem>>, vector<1x1x8x128xf32>
    %1 = vector.shape_cast %0 : vector<1x1x8x128xf32> to vector<8x128xf32>
    %c0_3 = arith.constant 0 : index
    %c0_4 = arith.constant 0 : index
    %2 = vector.load %arg6[%c0_3, %c0_4] : memref<64x128xf32, #tpu.memory_space<vmem>>, vector<8x128xf32>
    tpu.vector_store %arg6[%c0_3, %c0_4], %1 {strides = array<i32>} : memref<64x128xf32, #tpu.memory_space<vmem>>, vector<8x128xf32>,
    %c0_5 = arith.constant 0 : index
    %c1 = arith.constant 1 : index
    %c0_6 = arith.constant 0 : index
    %c0_7 = arith.constant 0 : index
    %3 = vector.load %arg2[%c0_5, %c1, %c0_6, %c0_7] : memref<1x16x8x128xf32, #tpu.memory_space<vmem>>, vector<1x1x8x128xf32>
    %4 = vector.shape_cast %3 : vector<1x1x8x128xf32> to vector<8x128xf32>
    %c0_8 = arith.constant 0 : index
    %c0_9 = arith.constant 0 : index
    %5 = vector.load %arg7[%c0_8, %c0_9] : memref<64x128xf32, #tpu.memory_space<vmem>>, vector<8x128xf32>
    tpu.vector_store %arg7[%c0_8, %c0_9], %4 {strides = array<i32>} : memref<64x128xf32, #tpu.memory_space<vmem>>, vector<8x128xf32>,
    %c0_10 = arith.constant 0 : index
    %c2 = arith.constant 2 : index
    %c0_11 = arith.constant 0 : index
    %c0_12 = arith.constant 0 : index
    %6 = vector.load %arg2[%c0_10, %c2, %c0_11, %c0_12] : memref<1x16x8x128xf32, #tpu.memory_space<vmem>>, vector<1x1x8x128xf32>
    %7 = vector.shape_cast %6 : vector<1x1x8x128xf32> to vector<8x128xf32>
    %c8 = arith.constant 8 : index
    %c0_13 = arith.constant 0 : index
    %8 = vector.load %arg6[%c8, %c0_13] : memref<64x128xf32, #tpu.memory_space<vmem>>, vector<8x128xf32>
    tpu.vector_store %arg6[%c8, %c0_13], %7 {strides = array<i32>} : memref<64x128xf32, #tpu.memory_space<vmem>>, vector<8x128xf32>,
    %c0_14 = arith.constant 0 : index
    %c3 = arith.constant 3 : index
    %c0_15 = arith.constant 0 : index
    %c0_16 = arith.constant 0 : index
    %9 = vector.load %arg2[%c0_14, %c3, %c0_15, %c0_16] : memref<1x16x8x128xf32, #tpu.memory_space<vmem>>, vector<1x1x8x128xf32>
    %10 = vector.shape_cast %9 : vector<1x1x8x128xf32> to vector<8x128xf32>
    %c8_17 = arith.constant 8 : index
    %c0_18 = arith.constant 0 : index
    %11 = vector.load %arg7[%c8_17, %c0_18] : memref<64x128xf32, #tpu.memory_space<vmem>>, vector<8x128xf32>
    tpu.vector_store %arg7[%c8_17, %c0_18], %10 {strides = array<i32>} : memref<64x128xf32, #tpu.memory_space<vmem>>, vector<8x128xf32>,
    %c0_19 = arith.constant 0 : index
    %c4 = arith.constant 4 : index
    %c0_20 = arith.constant 0 : index
    %c0_21 = arith.constant 0 : index
    %12 = vector.load %arg2[%c0_19, %c4, %c0_20, %c0_21] : memref<1x16x8x128xf32, #tpu.memory_space<vmem>>, vector<1x1x8x128xf32>
    %13 = vector.shape_cast %12 : vector<1x1x8x128xf32> to vector<8x128xf32>
    %c16 = arith.constant 16 : index
    %c0_22 = arith.constant 0 : index
    %14 = vector.load %arg6[%c16, %c0_22] : memref<64x128xf32, #tpu.memory_space<vmem>>, vector<8x128xf32>
    tpu.vector_store %arg6[%c16, %c0_22], %13 {strides = array<i32>} : memref<64x128xf32, #tpu.memory_space<vmem>>, vector<8x128xf32>,
    %c0_23 = arith.constant 0 : index
    %c5 = arith.constant 5 : index
    %c0_24 = arith.constant 0 : index
    %c0_25 = arith.constant 0 : index
    %15 = vector.load %arg2[%c0_23, %c5, %c0_24, %c0_25] : memref<1x16x8x128xf32, #tpu.memory_space<vmem>>, vector<1x1x8x128xf32>
    %16 = vector.shape_cast %15 : vector<1x1x8x128xf32> to vector<8x128xf32>
    %c16_26 = arith.constant 16 : index
    %c0_27 = arith.constant 0 : index
    %17 = vector.load %arg7[%c16_26, %c0_27] : memref<64x128xf32, #tpu.memory_space<vmem>>, vector<8x128xf32>
    tpu.vector_store %arg7[%c16_26, %c0_27], %16 {strides = array<i32>} : memref<64x128xf32, #tpu.memory_space<vmem>>, vector<8x128xf32>,
    %c0_28 = arith.constant 0 : index
    %c6 = arith.constant 6 : index
    %c0_29 = arith.constant 0 : index
    %c0_30 = arith.constant 0 : index
    %18 = vector.load %arg2[%c0_28, %c6, %c0_29, %c0_30] : memref<1x16x8x128xf32, #tpu.memory_space<vmem>>, vector<1x1x8x128xf32>
    %19 = vector.shape_cast %18 : vector<1x1x8x128xf32> to vector<8x128xf32>
    %c24 = arith.constant 24 : index
    %c0_31 = arith.constant 0 : index
    %20 = vector.load %arg6[%c24, %c0_31] : memref<64x128xf32, #tpu.memory_space<vmem>>, vector<8x128xf32>
    tpu.vector_store %arg6[%c24, %c0_31], %19 {strides = array<i32>} : memref<64x128xf32, #tpu.memory_space<vmem>>, vector<8x128xf32>,
    %c0_32 = arith.constant 0 : index
    %c7 = arith.constant 7 : index
    %c0_33 = arith.constant 0 : index
    %c0_34 = arith.constant 0 : index
    %21 = vector.load %arg2[%c0_32, %c7, %c0_33, %c0_34] : memref<1x16x8x128xf32, #tpu.memory_space<vmem>>, vector<1x1x8x128xf32>
    %22 = vector.shape_cast %21 : vector<1x1x8x128xf32> to vector<8x128xf32>
    %c24_35 = arith.constant 24 : index
    %c0_36 = arith.constant 0 : index
    %23 = vector.load %arg7[%c24_35, %c0_36] : memref<64x128xf32, #tpu.memory_space<vmem>>, vector<8x128xf32>
    tpu.vector_store %arg7[%c24_35, %c0_36], %22 {strides = array<i32>} : memref<64x128xf32, #tpu.memory_space<vmem>>, vector<8x128xf32>,
    %c0_37 = arith.constant 0 : index
    %c8_38 = arith.constant 8 : index
    %c0_39 = arith.constant 0 : index
    %c0_40 = arith.constant 0 : index
    %24 = vector.load %arg2[%c0_37, %c8_38, %c0_39, %c0_40] : memref<1x16x8x128xf32, #tpu.memory_space<vmem>>, vector<1x1x8x128xf32>
    %25 = vector.shape_cast %24 : vector<1x1x8x128xf32> to vector<8x128xf32>
    %c32 = arith.constant 32 : index
    %c0_41 = arith.constant 0 : index
    %26 = vector.load %arg6[%c32, %c0_41] : memref<64x128xf32, #tpu.memory_space<vmem>>, vector<8x128xf32>
    tpu.vector_store %arg6[%c32, %c0_41], %25 {strides = array<i32>} : memref<64x128xf32, #tpu.memory_space<vmem>>, vector<8x128xf32>,
    %c0_42 = arith.constant 0 : index
    %c9 = arith.constant 9 : index
    %c0_43 = arith.constant 0 : index
    %c0_44 = arith.constant 0 : index
    %27 = vector.load %arg2[%c0_42, %c9, %c0_43, %c0_44] : memref<1x16x8x128xf32, #tpu.memory_space<vmem>>, vector<1x1x8x128xf32>
    %28 = vector.shape_cast %27 : vector<1x1x8x128xf32> to vector<8x128xf32>
    %c32_45 = arith.constant 32 : index
    %c0_46 = arith.constant 0 : index
    %29 = vector.load %arg7[%c32_45, %c0_46] : memref<64x128xf32, #tpu.memory_space<vmem>>, vector<8x128xf32>
    tpu.vector_store %arg7[%c32_45, %c0_46], %28 {strides = array<i32>} : memref<64x128xf32, #tpu.memory_space<vmem>>, vector<8x128xf32>,
    %c0_47 = arith.constant 0 : index
    %c10 = arith.constant 10 : index
    %c0_48 = arith.constant 0 : index
    %c0_49 = arith.constant 0 : index
    %30 = vector.load %arg2[%c0_47, %c10, %c0_48, %c0_49] : memref<1x16x8x128xf32, #tpu.memory_space<vmem>>, vector<1x1x8x128xf32>
    %31 = vector.shape_cast %30 : vector<1x1x8x128xf32> to vector<8x128xf32>
    %c40 = arith.constant 40 : index
    %c0_50 = arith.constant 0 : index
    %32 = vector.load %arg6[%c40, %c0_50] : memref<64x128xf32, #tpu.memory_space<vmem>>, vector<8x128xf32>
    tpu.vector_store %arg6[%c40, %c0_50], %31 {strides = array<i32>} : memref<64x128xf32, #tpu.memory_space<vmem>>, vector<8x128xf32>,
    %c0_51 = arith.constant 0 : index
    %c11 = arith.constant 11 : index
    %c0_52 = arith.constant 0 : index
    %c0_53 = arith.constant 0 : index
    %33 = vector.load %arg2[%c0_51, %c11, %c0_52, %c0_53] : memref<1x16x8x128xf32, #tpu.memory_space<vmem>>, vector<1x1x8x128xf32>
    %34 = vector.shape_cast %33 : vector<1x1x8x128xf32> to vector<8x128xf32>
    %c40_54 = arith.constant 40 : index
    %c0_55 = arith.constant 0 : index
    %35 = vector.load %arg7[%c40_54, %c0_55] : memref<64x128xf32, #tpu.memory_space<vmem>>, vector<8x128xf32>
    tpu.vector_store %arg7[%c40_54, %c0_55], %34 {strides = array<i32>} : memref<64x128xf32, #tpu.memory_space<vmem>>, vector<8x128xf32>,
    %c0_56 = arith.constant 0 : index
    %c12 = arith.constant 12 : index
    %c0_57 = arith.constant 0 : index
    %c0_58 = arith.constant 0 : index
    %36 = vector.load %arg2[%c0_56, %c12, %c0_57, %c0_58] : memref<1x16x8x128xf32, #tpu.memory_space<vmem>>, vector<1x1x8x128xf32>
    %37 = vector.shape_cast %36 : vector<1x1x8x128xf32> to vector<8x128xf32>
    %c48 = arith.constant 48 : index
    %c0_59 = arith.constant 0 : index
    %38 = vector.load %arg6[%c48, %c0_59] : memref<64x128xf32, #tpu.memory_space<vmem>>, vector<8x128xf32>
    tpu.vector_store %arg6[%c48, %c0_59], %37 {strides = array<i32>} : memref<64x128xf32, #tpu.memory_space<vmem>>, vector<8x128xf32>,
    %c0_60 = arith.constant 0 : index
    %c13 = arith.constant 13 : index
    %c0_61 = arith.constant 0 : index
    %c0_62 = arith.constant 0 : index
    %39 = vector.load %arg2[%c0_60, %c13, %c0_61, %c0_62] : memref<1x16x8x128xf32, #tpu.memory_space<vmem>>, vector<1x1x8x128xf32>
    %40 = vector.shape_cast %39 : vector<1x1x8x128xf32> to vector<8x128xf32>
    %c48_63 = arith.constant 48 : index
    %c0_64 = arith.constant 0 : index
    %41 = vector.load %arg7[%c48_63, %c0_64] : memref<64x128xf32, #tpu.memory_space<vmem>>, vector<8x128xf32>
    tpu.vector_store %arg7[%c48_63, %c0_64], %40 {strides = array<i32>} : memref<64x128xf32, #tpu.memory_space<vmem>>, vector<8x128xf32>,
    %c0_65 = arith.constant 0 : index
    %c14 = arith.constant 14 : index
    %c0_66 = arith.constant 0 : index
    %c0_67 = arith.constant 0 : index
    %42 = vector.load %arg2[%c0_65, %c14, %c0_66, %c0_67] : memref<1x16x8x128xf32, #tpu.memory_space<vmem>>, vector<1x1x8x128xf32>
    %43 = vector.shape_cast %42 : vector<1x1x8x128xf32> to vector<8x128xf32>
    %c56 = arith.constant 56 : index
    %c0_68 = arith.constant 0 : index
    %44 = vector.load %arg6[%c56, %c0_68] : memref<64x128xf32, #tpu.memory_space<vmem>>, vector<8x128xf32>
    tpu.vector_store %arg6[%c56, %c0_68], %43 {strides = array<i32>} : memref<64x128xf32, #tpu.memory_space<vmem>>, vector<8x128xf32>,
    %c0_69 = arith.constant 0 : index
    %c15 = arith.constant 15 : index
    %c0_70 = arith.constant 0 : index
    %c0_71 = arith.constant 0 : index
    %45 = vector.load %arg2[%c0_69, %c15, %c0_70, %c0_71] : memref<1x16x8x128xf32, #tpu.memory_space<vmem>>, vector<1x1x8x128xf32>
    %46 = vector.shape_cast %45 : vector<1x1x8x128xf32> to vector<8x128xf32>
    %c56_72 = arith.constant 56 : index
    %c0_73 = arith.constant 0 : index
    %47 = vector.load %arg7[%c56_72, %c0_73] : memref<64x128xf32, #tpu.memory_space<vmem>>, vector<8x128xf32>
    tpu.vector_store %arg7[%c56_72, %c0_73], %46 {strides = array<i32>} : memref<64x128xf32, #tpu.memory_space<vmem>>, vector<8x128xf32>,
    %c0_74 = arith.constant 0 : index
    %c0_75 = arith.constant 0 : index
    %48 = vector.load %arg6[%c0_74, %c0_75] : memref<64x128xf32, #tpu.memory_space<vmem>>, vector<64x128xf32>
    %c0_76 = arith.constant 0 : index
    %c0_77 = arith.constant 0 : index
    %c0_78 = arith.constant 0 : index
    %49 = vector.load %arg3[%c0_76, %c0_77, %c0_78] : memref<2x128x128xf32, #tpu.memory_space<vmem>>, vector<1x128x128xf32>
    %50 = vector.shape_cast %49 : vector<1x128x128xf32> to vector<128x128xf32>
    %cst = arith.constant dense<0.000000e+00> : vector<64x128xf32>
    %51 = tpu.matmul %48, %50, %cst {dimension_numbers = #tpu.dot_dimension_numbers<[1], [0], [0], [1], [0, 0, 1, 1], [], []>} : vector<64x128xf32>, vector<128x128xf32>, vector<64x128xf32> -> vector<64x128xf32>
    %c0_79 = arith.constant 0 : index
    %c0_80 = arith.constant 0 : index
    %52 = vector.load %arg7[%c0_79, %c0_80] : memref<64x128xf32, #tpu.memory_space<vmem>>, vector<64x128xf32>
    %c1_81 = arith.constant 1 : index
    %c0_82 = arith.constant 0 : index
    %c0_83 = arith.constant 0 : index
    %53 = vector.load %arg3[%c1_81, %c0_82, %c0_83] : memref<2x128x128xf32, #tpu.memory_space<vmem>>, vector<1x128x128xf32>
    %54 = vector.shape_cast %53 : vector<1x128x128xf32> to vector<128x128xf32>
    %cst_84 = arith.constant dense<0.000000e+00> : vector<64x128xf32>
    %55 = tpu.matmul %52, %54, %cst_84 {dimension_numbers = #tpu.dot_dimension_numbers<[1], [0], [0], [1], [0, 0, 1, 1], [], []>} : vector<64x128xf32>, vector<128x128xf32>, vector<64x128xf32> -> vector<64x128xf32>
    %56 = arith.addf %51, %55 : vector<64x128xf32>
    %cst_85 = arith.constant dense<0.000000e+00> : vector<64xf32>
    %57 = vector.multi_reduction <add>, %56, %cst_85 [1] : vector<64x128xf32> to vector<64xf32>
    %58 = vector.shape_cast %57 : vector<64xf32> to vector<64x1xf32>
    %cst_86 = arith.constant 1.280000e+02 : f32
    %59 = vector.broadcast %cst_86 : f32 to vector<64x1xf32>
    %60 = arith.divf %58, %59 : vector<64x1xf32>
    %61 = vector.broadcast %60 : vector<64x1xf32> to vector<64x128xf32>
    %62 = arith.subf %56, %61 : vector<64x128xf32>
    %63 = arith.mulf %62, %62 : vector<64x128xf32>
    %cst_87 = arith.constant dense<0.000000e+00> : vector<64xf32>
    %64 = vector.multi_reduction <add>, %63, %cst_87 [1] : vector<64x128xf32> to vector<64xf32>
    %65 = vector.shape_cast %64 : vector<64xf32> to vector<64x1xf32>
    %cst_88 = arith.constant 1.280000e+02 : f32
    %66 = vector.broadcast %cst_88 : f32 to vector<64x1xf32>
    %67 = arith.divf %65, %66 : vector<64x1xf32>
    %cst_89 = arith.constant 9.99999974E-6 : f32
    %68 = vector.broadcast %cst_89 : f32 to vector<64x1xf32>
    %69 = arith.addf %67, %68 : vector<64x1xf32>
    %70 = math.rsqrt %69 : vector<64x1xf32>
    %71 = vector.broadcast %70 : vector<64x1xf32> to vector<64x128xf32>
    %72 = arith.mulf %62, %71 : vector<64x128xf32>
    %c0_90 = arith.constant 0 : index
    %c0_91 = arith.constant 0 : index
    %73 = vector.load %arg4[%c0_90, %c0_91] : memref<2x128xf32, #tpu.memory_space<vmem>>, vector<1x128xf32>
    %74 = vector.broadcast %73 : vector<1x128xf32> to vector<64x128xf32>
    %75 = arith.mulf %72, %74 : vector<64x128xf32>
    %c1_92 = arith.constant 1 : index
    %c0_93 = arith.constant 0 : index
    %76 = vector.load %arg4[%c1_92, %c0_93] : memref<2x128xf32, #tpu.memory_space<vmem>>, vector<1x128xf32>
    %77 = vector.broadcast %76 : vector<1x128xf32> to vector<64x128xf32>
    %78 = arith.addf %75, %77 : vector<64x128xf32>
    %79 = vector.extract_strided_slice %78 {offsets = [0, 0], sizes = [8, 128], strides = [1, 1]} : vector<64x128xf32> to vector<8x128xf32>
    %c0_94 = arith.constant 0 : index
    %c0_95 = arith.constant 0 : index
    %c0_96 = arith.constant 0 : index
    %c0_97 = arith.constant 0 : index
    %80 = vector.load %arg5[%c0_94, %c0_95, %c0_96, %c0_97] : memref<1x8x8x128xf32, #tpu.memory_space<vmem>>, vector<1x1x8x128xf32>
    %81 = vector.shape_cast %80 : vector<1x1x8x128xf32> to vector<8x128xf32>
    %82 = vector.shape_cast %79 : vector<8x128xf32> to vector<1x1x8x128xf32>
    tpu.vector_store %arg5[%c0_94, %c0_95, %c0_96, %c0_97], %82 {strides = array<i32>} : memref<1x8x8x128xf32, #tpu.memory_space<vmem>>, vector<1x1x8x128xf32>,
    %83 = vector.extract_strided_slice %78 {offsets = [8, 0], sizes = [8, 128], strides = [1, 1]} : vector<64x128xf32> to vector<8x128xf32>
    %c0_98 = arith.constant 0 : index
    %c1_99 = arith.constant 1 : index
    %c0_100 = arith.constant 0 : index
    %c0_101 = arith.constant 0 : index
    %84 = vector.load %arg5[%c0_98, %c1_99, %c0_100, %c0_101] : memref<1x8x8x128xf32, #tpu.memory_space<vmem>>, vector<1x1x8x128xf32>
    %85 = vector.shape_cast %84 : vector<1x1x8x128xf32> to vector<8x128xf32>
    %86 = vector.shape_cast %83 : vector<8x128xf32> to vector<1x1x8x128xf32>
    tpu.vector_store %arg5[%c0_98, %c1_99, %c0_100, %c0_101], %86 {strides = array<i32>} : memref<1x8x8x128xf32, #tpu.memory_space<vmem>>, vector<1x1x8x128xf32>,
    %87 = vector.extract_strided_slice %78 {offsets = [16, 0], sizes = [8, 128], strides = [1, 1]} : vector<64x128xf32> to vector<8x128xf32>
    %c0_102 = arith.constant 0 : index
    %c2_103 = arith.constant 2 : index
    %c0_104 = arith.constant 0 : index
    %c0_105 = arith.constant 0 : index
    %88 = vector.load %arg5[%c0_102, %c2_103, %c0_104, %c0_105] : memref<1x8x8x128xf32, #tpu.memory_space<vmem>>, vector<1x1x8x128xf32>
    %89 = vector.shape_cast %88 : vector<1x1x8x128xf32> to vector<8x128xf32>
    %90 = vector.shape_cast %87 : vector<8x128xf32> to vector<1x1x8x128xf32>
    tpu.vector_store %arg5[%c0_102, %c2_103, %c0_104, %c0_105], %90 {strides = array<i32>} : memref<1x8x8x128xf32, #tpu.memory_space<vmem>>, vector<1x1x8x128xf32>,
    %91 = vector.extract_strided_slice %78 {offsets = [24, 0], sizes = [8, 128], strides = [1, 1]} : vector<64x128xf32> to vector<8x128xf32>
    %c0_106 = arith.constant 0 : index
    %c3_107 = arith.constant 3 : index
    %c0_108 = arith.constant 0 : index
    %c0_109 = arith.constant 0 : index
    %92 = vector.load %arg5[%c0_106, %c3_107, %c0_108, %c0_109] : memref<1x8x8x128xf32, #tpu.memory_space<vmem>>, vector<1x1x8x128xf32>
    %93 = vector.shape_cast %92 : vector<1x1x8x128xf32> to vector<8x128xf32>
    %94 = vector.shape_cast %91 : vector<8x128xf32> to vector<1x1x8x128xf32>
    tpu.vector_store %arg5[%c0_106, %c3_107, %c0_108, %c0_109], %94 {strides = array<i32>} : memref<1x8x8x128xf32, #tpu.memory_space<vmem>>, vector<1x1x8x128xf32>,
    %95 = vector.extract_strided_slice %78 {offsets = [32, 0], sizes = [8, 128], strides = [1, 1]} : vector<64x128xf32> to vector<8x128xf32>
    %c0_110 = arith.constant 0 : index
    %c4_111 = arith.constant 4 : index
    %c0_112 = arith.constant 0 : index
    %c0_113 = arith.constant 0 : index
    %96 = vector.load %arg5[%c0_110, %c4_111, %c0_112, %c0_113] : memref<1x8x8x128xf32, #tpu.memory_space<vmem>>, vector<1x1x8x128xf32>
    %97 = vector.shape_cast %96 : vector<1x1x8x128xf32> to vector<8x128xf32>
    %98 = vector.shape_cast %95 : vector<8x128xf32> to vector<1x1x8x128xf32>
    tpu.vector_store %arg5[%c0_110, %c4_111, %c0_112, %c0_113], %98 {strides = array<i32>} : memref<1x8x8x128xf32, #tpu.memory_space<vmem>>, vector<1x1x8x128xf32>,
    %99 = vector.extract_strided_slice %78 {offsets = [40, 0], sizes = [8, 128], strides = [1, 1]} : vector<64x128xf32> to vector<8x128xf32>
    %c0_114 = arith.constant 0 : index
    %c5_115 = arith.constant 5 : index
    %c0_116 = arith.constant 0 : index
    %c0_117 = arith.constant 0 : index
    %100 = vector.load %arg5[%c0_114, %c5_115, %c0_116, %c0_117] : memref<1x8x8x128xf32, #tpu.memory_space<vmem>>, vector<1x1x8x128xf32>
    %101 = vector.shape_cast %100 : vector<1x1x8x128xf32> to vector<8x128xf32>
    %102 = vector.shape_cast %99 : vector<8x128xf32> to vector<1x1x8x128xf32>
    tpu.vector_store %arg5[%c0_114, %c5_115, %c0_116, %c0_117], %102 {strides = array<i32>} : memref<1x8x8x128xf32, #tpu.memory_space<vmem>>, vector<1x1x8x128xf32>,
    %103 = vector.extract_strided_slice %78 {offsets = [48, 0], sizes = [8, 128], strides = [1, 1]} : vector<64x128xf32> to vector<8x128xf32>
    %c0_118 = arith.constant 0 : index
    %c6_119 = arith.constant 6 : index
    %c0_120 = arith.constant 0 : index
    %c0_121 = arith.constant 0 : index
    %104 = vector.load %arg5[%c0_118, %c6_119, %c0_120, %c0_121] : memref<1x8x8x128xf32, #tpu.memory_space<vmem>>, vector<1x1x8x128xf32>
    %105 = vector.shape_cast %104 : vector<1x1x8x128xf32> to vector<8x128xf32>
    %106 = vector.shape_cast %103 : vector<8x128xf32> to vector<1x1x8x128xf32>
    tpu.vector_store %arg5[%c0_118, %c6_119, %c0_120, %c0_121], %106 {strides = array<i32>} : memref<1x8x8x128xf32, #tpu.memory_space<vmem>>, vector<1x1x8x128xf32>,
    %107 = vector.extract_strided_slice %78 {offsets = [56, 0], sizes = [8, 128], strides = [1, 1]} : vector<64x128xf32> to vector<8x128xf32>
    %c0_122 = arith.constant 0 : index
    %c7_123 = arith.constant 7 : index
    %c0_124 = arith.constant 0 : index
    %c0_125 = arith.constant 0 : index
    %108 = vector.load %arg5[%c0_122, %c7_123, %c0_124, %c0_125] : memref<1x8x8x128xf32, #tpu.memory_space<vmem>>, vector<1x1x8x128xf32>
    %109 = vector.shape_cast %108 : vector<1x1x8x128xf32> to vector<8x128xf32>
    %110 = vector.shape_cast %107 : vector<8x128xf32> to vector<1x1x8x128xf32>
    tpu.vector_store %arg5[%c0_122, %c7_123, %c0_124, %c0_125], %110 {strides = array<i32>} : memref<1x8x8x128xf32, #tpu.memory_space<vmem>>, vector<1x1x8x128xf32>,
    return
  }
  func.func @transform_0(%arg0: i32, %arg1: i32) -> (i32, i32, i32, i32) {
    %c0_i32 = arith.constant 0 : i32
    %c0_i32_0 = arith.constant 0 : i32
    %c0_i32_1 = arith.constant 0 : i32
    return %arg0, %arg1, %c0_i32, %c0_i32_0 : i32, i32, i32, i32
  }
  func.func @transform_1(%arg0: i32, %arg1: i32) -> (i32, i32, i32) {
    %c0_i32 = arith.constant 0 : i32
    %c0_i32_0 = arith.constant 0 : i32
    %c0_i32_1 = arith.constant 0 : i32
    %c0_i32_2 = arith.constant 0 : i32
    return %c0_i32, %c0_i32_0, %c0_i32_1 : i32, i32, i32
  }
  func.func @transform_2(%arg0: i32, %arg1: i32) -> (i32, i32) {
    %c0_i32 = arith.constant 0 : i32
    %c0_i32_0 = arith.constant 0 : i32
    %c0_i32_1 = arith.constant 0 : i32
    return %c0_i32, %c0_i32_0 : i32, i32
  }
  func.func @transform_3(%arg0: i32, %arg1: i32) -> (i32, i32, i32, i32) {
    %c0_i32 = arith.constant 0 : i32
    %c0_i32_0 = arith.constant 0 : i32
    %c0_i32_1 = arith.constant 0 : i32
    return %arg0, %arg1, %c0_i32, %c0_i32_0 : i32, i32, i32, i32
  }
}

</mosaic_0001>

<llo_original>
// kernel: patch_merging.1
$region0: #{patch_merging.1}
  #allocation0 [shape = 'u32[]', space=smem, size = 0x4, offset = 0x4, fixed_abs, tag = 'smem constant byte address 0x4 - core index']
  #allocation1 [shape = 'u32[144,128]{1,0:T(1,128)}', space=vmem, size = 0x12000, scoped, tag = 'internal scratch']
  #allocation2 [shape = 'f32[64,128]{1,0:T(8,128)}', space=vmem, size = 0x8000, scoped, tag = 'scratch operand']
  #allocation3 [shape = 'f32[64,128]{1,0:T(8,128)}', space=vmem, size = 0x8000, scoped, tag = 'scratch operand']
  %s0 = inlined_call_operand.vmem [shape: f32[2,16,8,128], index: 0, kind: input, shape index: {}]
  %s1 = inlined_call_operand.vmem [shape: f32[2,128,128], index: 1, kind: input, shape index: {}]
  %s2 = inlined_call_operand.vmem [shape: f32[2,128], index: 2, kind: input, shape index: {}]
  %s3 = inlined_call_operand.hbm [shape: f32[2,8,8,128], index: 3, kind: output, shape index: {}]
  %s4 = sld [smem:[#allocation0]]
  $region45: #{patch_merging.1} parent=0
    _
  %s6 = ssub.s32 1, %s4
  %s7 = scalar_select 0, %s6, %s4
  $region1: #{patch_merging.1} parent=0
    #allocation4 [shape = 'u8[65536]{0}', space=vmem, size = 0x10000, scoped, tag = 'output window, operand 0']
    #allocation5 [shape = 's32[2]{0}', space=sflag, size = 0x8, scoped, tag = 'scoped memory for patch_merging.1']
    %8 = vsyncpa [#allocation5], 0
    %s9 = scalar_lea.sflag [#allocation5], 1
    %10 = vsyncpa %s9, 0
    loop: start=0, step=1, limit=4
    $region2: #{patch_merging.1} parent=1 // loop_pre_header
      _
    $region3: #{patch_merging.1} parent=1 // loop_header
      %s12 = sphi 0, %s16
      %p13 = scmp.ge.s32.totalorder %s12, 4
      %s19 = sphi 0, %s31
      %s20 = sphi 0, %s27
      %s21 = sphi 0, %s19
      %s22 = sphi 0, %s20
      %s23 = sphi 0, %s21
      %s24 = sphi 0, %s22
      %s36 = sphi 0, %s38
      %s39 = sphi 0, %s36
      %s40 = sphi 0, %s39
      %s56 = sphi 0, %s40
      %s60 = sphi 0, %s60
      %s62 = sphi 0, %s60
      %s63 = sphi 0, %s62
      %s77 = sphi 0, %s63
      %s81 = sphi 0, %s81
      %s83 = sphi 0, %s81
      %s84 = sphi 0, %s83
      %s98 = sphi 0, %s84
      %s106 = sphi 0, %s108
      %s109 = sphi 0, %s106
      %s110 = sphi 0, %s109
      %s126 = sphi 0, %s110
    $region4: #{patch_merging.1} parent=1 // loop_header_branch
      %15 = sbr.rel (%p13) target = $region8
    $region5: #{patch_merging.1} parent=1 // loop_body
      %s17 = ssub.s32 %s12, 1
      %s18 = ssub.s32 %s12, 2
      %s25 = sadd.s32 1, %s20
      %p26 = scmp.ge.s32.totalorder %s25, 1
      %s27 = scalar_select %p26, 0, %s25
      %s28 = sadd.s32 1, %s19
      %s29 = scalar_select %p26, %s28, %s19
      %p30 = scmp.ge.s32.totalorder %s29, 2
      %s31 = scalar_select %p30, 0, %s29
      %s32 = ssub.s32 %s19, %s31
      %s33 = ssub.s32 %s20, %s27
      %s34 = sor.u32 %s32, %s33
      %p35 = scmp.eq.s32.totalorder %s34, 0
      %s37 = sadd.s32 %s36, 1
      %s38 = scalar_select %p35, %s36, %s37
      %p41 = pneg %p35
      %p42 = scmp.eq.s32.totalorder %s12, 1
      %p43 = por %p41, %p42
      %p44 = scmp.ne.s32.totalorder %s36, %s39
      %p45 = scmp.eq.s32.totalorder %s12, 0
      %p46 = por %p44, %p45
      %p47 = scmp.ne.s32.totalorder %s36, %s39
      %p48 = scmp.eq.s32.totalorder %s17, 1
      %p49 = por %p47, %p48
      %p50 = scmp.ne.s32.totalorder %s39, %s40
      %p51 = scmp.eq.s32.totalorder %s17, 0
      %p52 = por %p50, %p51
      %p53 = scmp.ne.s32.totalorder %s39, %s40
      %p54 = scmp.eq.s32.totalorder %s18, 1
      %p55 = por %p53, %p54
      %p57 = scmp.ne.s32.totalorder %s40, %s56
      %p58 = scmp.eq.s32.totalorder %s18, 0
      %p59 = por %p57, %p58
      %s61 = sadd.s32 %s60, 1
      %p64 = scmp.eq.s32.totalorder %s12, 1
      %p65 = scmp.ne.s32.totalorder %s60, %s62
      %p66 = scmp.eq.s32.totalorder %s12, 0
      %p67 = por %p65, %p66
      %p68 = scmp.ne.s32.totalorder %s60, %s62
      %p69 = scmp.eq.s32.totalorder %s17, 1
      %p70 = por %p68, %p69
      %p71 = scmp.ne.s32.totalorder %s62, %s63
      %p72 = scmp.eq.s32.totalorder %s17, 0
      %p73 = por %p71, %p72
      %p74 = scmp.ne.s32.totalorder %s62, %s63
      %p75 = scmp.eq.s32.totalorder %s18, 1
      %p76 = por %p74, %p75
      %p78 = scmp.ne.s32.totalorder %s63, %s77
      %p79 = scmp.eq.s32.totalorder %s18, 0
      %p80 = por %p78, %p79
      %s82 = sadd.s32 %s81, 1
      %p85 = scmp.eq.s32.totalorder %s12, 1
      %p86 = scmp.ne.s32.totalorder %s81, %s83
      %p87 = scmp.eq.s32.totalorder %s12, 0
      %p88 = por %p86, %p87
      %p89 = scmp.ne.s32.totalorder %s81, %s83
      %p90 = scmp.eq.s32.totalorder %s17, 1
      %p91 = por %p89, %p90
      %p92 = scmp.ne.s32.totalorder %s83, %s84
      %p93 = scmp.eq.s32.totalorder %s17, 0
      %p94 = por %p92, %p93
      %p95 = scmp.ne.s32.totalorder %s83, %s84
      %p96 = scmp.eq.s32.totalorder %s18, 1
      %p97 = por %p95, %p96
      %p99 = scmp.ne.s32.totalorder %s84, %s98
      %p100 = scmp.eq.s32.totalorder %s18, 0
      %p101 = por %p99, %p100
      %s102 = ssub.s32 %s19, %s31
      %s103 = ssub.s32 %s20, %s27
      %s104 = sor.u32 %s102, %s103
      %p105 = scmp.eq.s32.totalorder %s104, 0
      %s107 = sadd.s32 %s106, 1
      %s108 = scalar_select %p105, %s106, %s107
      %p111 = pneg %p105
      %p112 = scmp.eq.s32.totalorder %s12, 1
      %p113 = por %p111, %p112
      %p114 = scmp.ne.s32.totalorder %s106, %s109
      %p115 = scmp.eq.s32.totalorder %s12, 0
      %p116 = por %p114, %p115
      %p117 = scmp.ne.s32.totalorder %s106, %s109
      %p118 = scmp.eq.s32.totalorder %s17, 1
      %p119 = por %p117, %p118
      %p120 = scmp.ne.s32.totalorder %s109, %s110
      %p121 = scmp.eq.s32.totalorder %s17, 0
      %p122 = por %p120, %p121
      %p123 = scmp.ne.s32.totalorder %s109, %s110
      %p124 = scmp.eq.s32.totalorder %s18, 1
      %p125 = por %p123, %p124
      %p127 = scmp.ne.s32.totalorder %s110, %s126
      %p128 = scmp.eq.s32.totalorder %s18, 0
      %p129 = por %p127, %p128
      %p130 = scmp.le.s32.totalorder 1, %s12
      %p131 = scmp.lt.s32.totalorder %s12, 3
      %p132 = pnand %p130, %p131
      %p133 = pneg %p132
      // Predicated region
      $region9: #{patch_merging.1} parent=5 // pred_check
        _
      $region10: #{patch_merging.1} parent=5 // pred_check_branch
        %135 = sbr.rel (%p132) target = $region12
      $region11: #{patch_merging.1} parent=5 // pred_region
        %s136 = ssub.s32 %s12, 1
        // Predicated region
        $region13: #{patch_merging.1} parent=11 // pred_check
          %p137 = pneg %p73
        $region14: #{patch_merging.1} parent=11 // pred_check_branch
          %139 = sbr.rel (%p137) target = $region16
        $region15: #{patch_merging.1} parent=11 // pred_region
          _
        $region16: #{patch_merging.1} parent=11 // pred_fallthru
          _
        // Predicated region
        $region17: #{patch_merging.1} parent=11 // pred_check
          %p140 = pneg %p94
        $region18: #{patch_merging.1} parent=11 // pred_check_branch
          %142 = sbr.rel (%p140) target = $region20
        $region19: #{patch_merging.1} parent=11 // pred_region
          _
        $region20: #{patch_merging.1} parent=11 // pred_fallthru
          _
      $region12: #{patch_merging.1} parent=5 // pred_fallthru
        _
      %p143 = scmp.lt.s32.totalorder %s12, 2
      // Predicated region
      $region21: #{patch_merging.1} parent=5 // pred_check
        %p144 = pneg %p143
      $region22: #{patch_merging.1} parent=5 // pred_check_branch
        %146 = sbr.rel (%p144) target = $region24
      $region23: #{patch_merging.1} parent=5 // pred_region
        // Predicated region
        $region25: #{patch_merging.1} parent=23 // pred_check
          %p147 = pneg %p46
        $region26: #{patch_merging.1} parent=23 // pred_check_branch
          %149 = sbr.rel (%p147) target = $region28
        $region27: #{patch_merging.1} parent=23 // pred_region
          %s150 = smul.u32 16, %s20
          %p151 = scmp.lt.s32.totalorder %s19, 1
          %s152 = scalar_select %p151, %s19, 1
          %p153 = scmp.lt.s32.totalorder %s150, 15
          %s154 = scalar_select %p153, %s150, 15
          %s155 = smul.addr %s152, 16
          %s156 = sadd.s32 %s154, %s155
          %s157 = smul.addr %s156, 8
          %s158 = scalar_lea.vmem %s0, %s157
          %s159 = smul.u32 16, %s20
        $region28: #{patch_merging.1} parent=23 // pred_fallthru
          _
      $region24: #{patch_merging.1} parent=5 // pred_fallthru
        _
      %p160 = scmp.le.s32.totalorder 1, %s12
      %p161 = scmp.lt.s32.totalorder %s12, 3
      %p162 = pnand %p160, %p161
      %p163 = pneg %p162
      // Predicated region
      $region29: #{patch_merging.1} parent=5 // pred_check
        _
      $region30: #{patch_merging.1} parent=5 // pred_check_branch
        %165 = sbr.rel (%p162) target = $region32
      $region31: #{patch_merging.1} parent=5 // pred_region
        %s166 = ssub.s32 %s12, 1
        %s167 = smul.u32 16, %s22
        %p168 = scmp.lt.s32.totalorder %s21, 1
        %s169 = scalar_select %p168, %s21, 1
        %p170 = scmp.lt.s32.totalorder %s167, 15
        %s171 = scalar_select %p170, %s167, 15
        %s172 = smul.addr %s169, 16
        %s173 = sadd.s32 %s171, %s172
        %s174 = smul.addr %s173, 8
        %s175 = scalar_lea.vmem %s0, %s174
        %p176 = pneg %p52
        %p177 = pneg %p49
        %p178 = pneg %p73
        %p179 = pneg %p70
        %p180 = pneg %p94
        %p181 = pneg %p91
        %p182 = pneg %p122
        %p183 = pneg %p119
        %s184 = sand.u32 %s109, 1
        %s185 = scalar_lea.sflag [#allocation5], %s184
        %s186 = sand.u32 %s109, 1
        %s187 = smul.addr %s186, 64
        %s188 = scalar_lea.vmem [#allocation4], %s187
        %s189 = smul.u32 16, %s22
        %p190 = scmp.lt.s32.totalorder %s21, 1
        %s191 = scalar_select %p190, %s21, 1
        %p192 = scmp.lt.s32.totalorder %s189, 15
        %s193 = scalar_select %p192, %s189, 15
        %s194 = smul.addr %s191, 16
        %s195 = sadd.s32 %s193, %s194
        %s196 = smul.addr %s195, 8
        %s197 = scalar_lea.vmem %s0, %s196
        %s198 = smul.u32 16, %s22
        %s199 = smul.u32 8, %s22
        %v200 = vld [vmem:[%s197] sm:$0xff]
        %201 = vst [vmem:[#allocation2] sm:$0xff] %v200
        %s202 = scalar_lea.vmem %s197, 8
        %v203 = vld [vmem:[%s202] sm:$0xff]
        %204 = vst [vmem:[#allocation3] sm:$0xff] %v203
        %s205 = scalar_lea.vmem %s197, 16
        %v206 = vld [vmem:[%s205] sm:$0xff]
        %207 = vst [vmem:[#allocation2 + $0x8] sm:$0xff] %v206
        %s208 = scalar_lea.vmem %s197, 24
        %v209 = vld [vmem:[%s208] sm:$0xff]
        %210 = vst [vmem:[#allocation3 + $0x8] sm:$0xff] %v209
        %s211 = scalar_lea.vmem %s197, 32
        %v212 = vld [vmem:[%s211] sm:$0xff]
        %213 = vst [vmem:[#allocation2 + $0x10] sm:$0xff] %v212
        %s214 = scalar_lea.vmem %s197, 40
        %v215 = vld [vmem:[%s214] sm:$0xff]
        %216 = vst [vmem:[#allocation3 + $0x10] sm:$0xff] %v215
        %s217 = scalar_lea.vmem %s197, 48
        %v218 = vld [vmem:[%s217] sm:$0xff]
        %219 = vst [vmem:[#allocation2 + $0x18] sm:$0xff] %v218
        %s220 = scalar_lea.vmem %s197, 56
        %v221 = vld [vmem:[%s220] sm:$0xff]
        %222 = vst [vmem:[#allocation3 + $0x18] sm:$0xff] %v221
        %s223 = scalar_lea.vmem %s197, 64
        %v224 = vld [vmem:[%s223] sm:$0xff]
        %225 = vst [vmem:[#allocation2 + $0x20] sm:$0xff] %v224
        %s226 = scalar_lea.vmem %s197, 72
        %v227 = vld [vmem:[%s226] sm:$0xff]
        %228 = vst [vmem:[#allocation3 + $0x20] sm:$0xff] %v227
        %s229 = scalar_lea.vmem %s197, 80
        %v230 = vld [vmem:[%s229] sm:$0xff]
        %231 = vst [vmem:[#allocation2 + $0x28] sm:$0xff] %v230
        %s232 = scalar_lea.vmem %s197, 88
        %v233 = vld [vmem:[%s232] sm:$0xff]
        %234 = vst [vmem:[#allocation3 + $0x28] sm:$0xff] %v233
        %s235 = scalar_lea.vmem %s197, 96
        %v236 = vld [vmem:[%s235] sm:$0xff]
        %237 = vst [vmem:[#allocation2 + $0x30] sm:$0xff] %v236
        %s238 = scalar_lea.vmem %s197, 104
        %v239 = vld [vmem:[%s238] sm:$0xff]
        %240 = vst [vmem:[#allocation3 + $0x30] sm:$0xff] %v239
        %s241 = scalar_lea.vmem %s197, 112
        %v242 = vld [vmem:[%s241] sm:$0xff]
        %243 = vst [vmem:[#allocation2 + $0x38] sm:$0xff] %v242
        %s244 = scalar_lea.vmem %s197, 120
        %v245 = vld [vmem:[%s244] sm:$0xff]
        %246 = vst [vmem:[#allocation3 + $0x38] sm:$0xff] %v245
        %v247 = vld [vmem:[#allocation2] sm:$0xff]
        %v248 = vld [vmem:[#allocation2 + $0x8] sm:$0xff]
        %v249 = vld [vmem:[#allocation2 + $0x10] sm:$0xff]
        %v250 = vld [vmem:[#allocation2 + $0x18] sm:$0xff]
        %v251 = vld [vmem:[#allocation2 + $0x20] sm:$0xff]
        %v252 = vld [vmem:[#allocation2 + $0x28] sm:$0xff]
        %v253 = vld [vmem:[#allocation2 + $0x30] sm:$0xff]
        %v254 = vld [vmem:[#allocation2 + $0x38] sm:$0xff]
        %v255 = vld [vmem:[%s1] sm:$0xff]
        %v256 = vld [vmem:[%s1 + $0x8] sm:$0xff]
        %v257 = vld [vmem:[%s1 + $0x10] sm:$0xff]
        %v258 = vld [vmem:[%s1 + $0x18] sm:$0xff]
        %v259 = vld [vmem:[%s1 + $0x20] sm:$0xff]
        %v260 = vld [vmem:[%s1 + $0x28] sm:$0xff]
        %v261 = vld [vmem:[%s1 + $0x30] sm:$0xff]
        %v262 = vld [vmem:[%s1 + $0x38] sm:$0xff]
        %v263 = vld [vmem:[%s1 + $0x40] sm:$0xff]
        %v264 = vld [vmem:[%s1 + $0x48] sm:$0xff]
        %v265 = vld [vmem:[%s1 + $0x50] sm:$0xff]
        %v266 = vld [vmem:[%s1 + $0x58] sm:$0xff]
        %v267 = vld [vmem:[%s1 + $0x60] sm:$0xff]
        %v268 = vld [vmem:[%s1 + $0x68] sm:$0xff]
        %v269 = vld [vmem:[%s1 + $0x70] sm:$0xff]
        %v270 = vld [vmem:[%s1 + $0x78] sm:$0xff]
        %v271 = vld [vmem:[#allocation3] sm:$0xff]
        %v272 = vld [vmem:[#allocation3 + $0x8] sm:$0xff]
        %v273 = vld [vmem:[#allocation3 + $0x10] sm:$0xff]
        %v274 = vld [vmem:[#allocation3 + $0x18] sm:$0xff]
        %v275 = vld [vmem:[#allocation3 + $0x20] sm:$0xff]
        %v276 = vld [vmem:[#allocation3 + $0x28] sm:$0xff]
        %v277 = vld [vmem:[#allocation3 + $0x30] sm:$0xff]
        %v278 = vld [vmem:[#allocation3 + $0x38] sm:$0xff]
        %s279 = scalar_lea.vmem %s1, 128
        %v280 = vld [vmem:[%s279] sm:$0xff]
        %v281 = vld [vmem:[%s279 + $0x8] sm:$0xff]
        %v282 = vld [vmem:[%s279 + $0x10] sm:$0xff]
        %v283 = vld [vmem:[%s279 + $0x18] sm:$0xff]
        %v284 = vld [vmem:[%s279 + $0x20] sm:$0xff]
        %v285 = vld [vmem:[%s279 + $0x28] sm:$0xff]
        %v286 = vld [vmem:[%s279 + $0x30] sm:$0xff]
        %v287 = vld [vmem:[%s279 + $0x38] sm:$0xff]
        %v288 = vld [vmem:[%s279 + $0x40] sm:$0xff]
        %v289 = vld [vmem:[%s279 + $0x48] sm:$0xff]
        %v290 = vld [vmem:[%s279 + $0x50] sm:$0xff]
        %v291 = vld [vmem:[%s279 + $0x58] sm:$0xff]
        %v292 = vld [vmem:[%s279 + $0x60] sm:$0xff]
        %v293 = vld [vmem:[%s279 + $0x68] sm:$0xff]
        %v294 = vld [vmem:[%s279 + $0x70] sm:$0xff]
        %v295 = vld [vmem:[%s279 + $0x78] sm:$0xff]
        %296 = vmatprep.subr.mxu0 0.0
        %297 = vmatpush1.msra.mxu0 %v295
        %298 = vmatprep.subr.mxu0 0.0
        %299 = vmatpush1.msra.mxu0 %v294
        %300 = vmatprep.subr.mxu0 0.0
        %301 = vmatpush1.msra.mxu0 %v293
        %302 = vmatprep.subr.mxu0 0.0
        %303 = vmatpush1.msra.mxu0 %v292
        %304 = vmatprep.subr.mxu0 0.0
        %305 = vmatpush1.msra.mxu0 %v291
        %306 = vmatprep.subr.mxu0 0.0
        %307 = vmatpush1.msra.mxu0 %v290
        %308 = vmatprep.subr.mxu0 0.0
        %309 = vmatpush1.msra.mxu0 %v289
        %310 = vmatprep.subr.mxu0 0.0
        %311 = vmatpush1.msra.mxu0 %v288
        %312 = vmatprep.subr.mxu0 0.0
        %313 = vmatpush1.msra.mxu0 %v287
        %314 = vmatprep.subr.mxu0 0.0
        %315 = vmatpush1.msra.mxu0 %v286
        %316 = vmatprep.subr.mxu0 0.0
        %317 = vmatpush1.msra.mxu0 %v285
        %318 = vmatprep.subr.mxu0 0.0
        %319 = vmatpush1.msra.mxu0 %v284
        %320 = vmatprep.subr.mxu0 0.0
        %321 = vmatpush1.msra.mxu0 %v283
        %322 = vmatprep.subr.mxu0 0.0
        %323 = vmatpush1.msra.mxu0 %v282
        %324 = vmatprep.subr.mxu0 0.0
        %325 = vmatpush1.msra.mxu0 %v281
        %326 = vmatprep.subr.mxu0 0.0
        %327 = vmatpush1.msra.mxu0 %v280
        %328 = vmatprep.subr.mxu0 0.0
        %329 = vmatpush2.msra.mxu0 0.0
        %330 = vmatprep.subr.mxu0 0.0
        %331 = vmatpush2.msra.mxu0 0.0
        %332 = vmatprep.subr.mxu0 0.0
        %333 = vmatpush2.msra.mxu0 0.0
        %334 = vmatprep.subr.mxu0 0.0
        %335 = vmatpush2.msra.mxu0 0.0
        %336 = vmatprep.subr.mxu0 0.0
        %337 = vmatpush2.msra.mxu0 0.0
        %338 = vmatprep.subr.mxu0 0.0
        %339 = vmatpush2.msra.mxu0 0.0
        %340 = vmatprep.subr.mxu0 0.0
        %341 = vmatpush2.msra.mxu0 0.0
        %342 = vmatprep.subr.mxu0 0.0
        %343 = vmatpush2.msra.mxu0 0.0
        %344 = vmatprep.subr.mxu0 0.0
        %345 = vmatpush2.msra.mxu0 0.0
        %346 = vmatprep.subr.mxu0 0.0
        %347 = vmatpush2.msra.mxu0 0.0
        %348 = vmatprep.subr.mxu0 0.0
        %349 = vmatpush2.msra.mxu0 0.0
        %350 = vmatprep.subr.mxu0 0.0
        %351 = vmatpush2.msra.mxu0 0.0
        %352 = vmatprep.subr.mxu0 0.0
        %353 = vmatpush2.msra.mxu0 0.0
        %354 = vmatprep.subr.mxu0 0.0
        %355 = vmatpush2.msra.mxu0 0.0
        %356 = vmatprep.subr.mxu0 0.0
        %357 = vmatpush2.msra.mxu0 0.0
        %358 = vmatprep.subr.mxu0 0.0
        %359 = vmatpush2.msra.mxu0 0.0
        %360 = vmatprep.mubr.f32.mxu0 0.0
        %361 = vmatmul.mubr.f32.gmra.mxu0 %v271
        %v362 = vpop.f32.mrf.mxu0
        %v363 = vadd.f32 0.0, %v362
        %v364 = vpop.f32.mrf.mxu0
        %365 = vmatprep.mubr.f32.mxu0 0.0
        %366 = vmatmul.mubr.f32.gmra.mxu0 %v272
        %v367 = vpop.f32.mrf.mxu0
        %v368 = vadd.f32 0.0, %v367
        %v369 = vpop.f32.mrf.mxu0
        %370 = vmatprep.mubr.f32.mxu0 0.0
        %371 = vmatmul.mubr.f32.gmra.mxu0 %v273
        %v372 = vpop.f32.mrf.mxu0
        %v373 = vadd.f32 0.0, %v372
        %v374 = vpop.f32.mrf.mxu0
        %375 = vmatprep.mubr.f32.mxu0 0.0
        %376 = vmatmul.mubr.f32.gmra.mxu0 %v274
        %v377 = vpop.f32.mrf.mxu0
        %v378 = vadd.f32 0.0, %v377
        %v379 = vpop.f32.mrf.mxu0
        %380 = vmatprep.mubr.f32.mxu0 0.0
        %381 = vmatmul.mubr.f32.gmra.mxu0 %v275
        %v382 = vpop.f32.mrf.mxu0
        %v383 = vadd.f32 0.0, %v382
        %v384 = vpop.f32.mrf.mxu0
        %385 = vmatprep.mubr.f32.mxu0 0.0
        %386 = vmatmul.mubr.f32.gmra.mxu0 %v276
        %v387 = vpop.f32.mrf.mxu0
        %v388 = vadd.f32 0.0, %v387
        %v389 = vpop.f32.mrf.mxu0
        %390 = vmatprep.mubr.f32.mxu0 0.0
        %391 = vmatmul.mubr.f32.gmra.mxu0 %v277
        %v392 = vpop.f32.mrf.mxu0
        %v393 = vadd.f32 0.0, %v392
        %v394 = vpop.f32.mrf.mxu0
        %395 = vmatprep.mubr.f32.mxu0 0.0
        %396 = vmatmul.mubr.f32.gmra.mxu0 %v278
        %v397 = vpop.f32.mrf.mxu0
        %v398 = vadd.f32 0.0, %v397
        %v399 = vpop.f32.mrf.mxu0
        %400 = vdwg.mxu0
        %401 = vmatprep.subr.mxu0 0.0
        %402 = vmatpush1.msra.mxu0 %v270
        %403 = vmatprep.subr.mxu0 0.0
        %404 = vmatpush1.msra.mxu0 %v269
        %405 = vmatprep.subr.mxu0 0.0
        %406 = vmatpush1.msra.mxu0 %v268
        %407 = vmatprep.subr.mxu0 0.0
        %408 = vmatpush1.msra.mxu0 %v267
        %409 = vmatprep.subr.mxu0 0.0
        %410 = vmatpush1.msra.mxu0 %v266
        %411 = vmatprep.subr.mxu0 0.0
        %412 = vmatpush1.msra.mxu0 %v265
        %413 = vmatprep.subr.mxu0 0.0
        %414 = vmatpush1.msra.mxu0 %v264
        %415 = vmatprep.subr.mxu0 0.0
        %416 = vmatpush1.msra.mxu0 %v263
        %417 = vmatprep.subr.mxu0 0.0
        %418 = vmatpush1.msra.mxu0 %v262
        %419 = vmatprep.subr.mxu0 0.0
        %420 = vmatpush1.msra.mxu0 %v261
        %421 = vmatprep.subr.mxu0 0.0
        %422 = vmatpush1.msra.mxu0 %v260
        %423 = vmatprep.subr.mxu0 0.0
        %424 = vmatpush1.msra.mxu0 %v259
        %425 = vmatprep.subr.mxu0 0.0
        %426 = vmatpush1.msra.mxu0 %v258
        %427 = vmatprep.subr.mxu0 0.0
        %428 = vmatpush1.msra.mxu0 %v257
        %429 = vmatprep.subr.mxu0 0.0
        %430 = vmatpush1.msra.mxu0 %v256
        %431 = vmatprep.subr.mxu0 0.0
        %432 = vmatpush1.msra.mxu0 %v255
        %433 = vmatprep.subr.mxu0 0.0
        %434 = vmatpush2.msra.mxu0 0.0
        %435 = vmatprep.subr.mxu0 0.0
        %436 = vmatpush2.msra.mxu0 0.0
        %437 = vmatprep.subr.mxu0 0.0
        %438 = vmatpush2.msra.mxu0 0.0
        %439 = vmatprep.subr.mxu0 0.0
        %440 = vmatpush2.msra.mxu0 0.0
        %441 = vmatprep.subr.mxu0 0.0
        %442 = vmatpush2.msra.mxu0 0.0
        %443 = vmatprep.subr.mxu0 0.0
        %444 = vmatpush2.msra.mxu0 0.0
        %445 = vmatprep.subr.mxu0 0.0
        %446 = vmatpush2.msra.mxu0 0.0
        %447 = vmatprep.subr.mxu0 0.0
        %448 = vmatpush2.msra.mxu0 0.0
        %449 = vmatprep.subr.mxu0 0.0
        %450 = vmatpush2.msra.mxu0 0.0
        %451 = vmatprep.subr.mxu0 0.0
        %452 = vmatpush2.msra.mxu0 0.0
        %453 = vmatprep.subr.mxu0 0.0
        %454 = vmatpush2.msra.mxu0 0.0
        %455 = vmatprep.subr.mxu0 0.0
        %456 = vmatpush2.msra.mxu0 0.0
        %457 = vmatprep.subr.mxu0 0.0
        %458 = vmatpush2.msra.mxu0 0.0
        %459 = vmatprep.subr.mxu0 0.0
        %460 = vmatpush2.msra.mxu0 0.0
        %461 = vmatprep.subr.mxu0 0.0
        %462 = vmatpush2.msra.mxu0 0.0
        %463 = vmatprep.subr.mxu0 0.0
        %464 = vmatpush2.msra.mxu0 0.0
        %465 = vmatprep.mubr.f32.mxu0 0.0
        %466 = vmatmul.mubr.f32.gmra.mxu0 %v247
        %v467 = vpop.f32.mrf.mxu0
        %v468 = vadd.f32 %v363, %v467
        %v469 = vpop.f32.mrf.mxu0
        %470 = vmatprep.mubr.f32.mxu0 0.0
        %471 = vmatmul.mubr.f32.gmra.mxu0 %v248
        %v472 = vpop.f32.mrf.mxu0
        %v473 = vadd.f32 %v368, %v472
        %v474 = vpop.f32.mrf.mxu0
        %475 = vmatprep.mubr.f32.mxu0 0.0
        %476 = vmatmul.mubr.f32.gmra.mxu0 %v249
        %v477 = vpop.f32.mrf.mxu0
        %v478 = vadd.f32 %v373, %v477
        %v479 = vpop.f32.mrf.mxu0
        %480 = vmatprep.mubr.f32.mxu0 0.0
        %481 = vmatmul.mubr.f32.gmra.mxu0 %v250
        %v482 = vpop.f32.mrf.mxu0
        %v483 = vadd.f32 %v378, %v482
        %v484 = vpop.f32.mrf.mxu0
        %485 = vmatprep.mubr.f32.mxu0 0.0
        %486 = vmatmul.mubr.f32.gmra.mxu0 %v251
        %v487 = vpop.f32.mrf.mxu0
        %v488 = vadd.f32 %v383, %v487
        %v489 = vpop.f32.mrf.mxu0
        %490 = vmatprep.mubr.f32.mxu0 0.0
        %491 = vmatmul.mubr.f32.gmra.mxu0 %v252
        %v492 = vpop.f32.mrf.mxu0
        %v493 = vadd.f32 %v388, %v492
        %v494 = vpop.f32.mrf.mxu0
        %495 = vmatprep.mubr.f32.mxu0 0.0
        %496 = vmatmul.mubr.f32.gmra.mxu0 %v253
        %v497 = vpop.f32.mrf.mxu0
        %v498 = vadd.f32 %v393, %v497
        %v499 = vpop.f32.mrf.mxu0
        %500 = vmatprep.mubr.f32.mxu0 0.0
        %501 = vmatmul.mubr.f32.gmra.mxu0 %v254
        %v502 = vpop.f32.mrf.mxu0
        %v503 = vadd.f32 %v398, %v502
        %v504 = vpop.f32.mrf.mxu0
        %505 = vdwg.mxu0
        %506 = vadd.xlane.f32.xlu0 %v468
        %v507 = vpop.xlane.xlu0 %506
        %508 = vadd.xlane.f32.xlu0 %v473
        %v509 = vpop.xlane.xlu0 %508
        %510 = vadd.xlane.f32.xlu0 %v478
        %v511 = vpop.xlane.xlu0 %510
        %512 = vadd.xlane.f32.xlu0 %v483
        %v513 = vpop.xlane.xlu0 %512
        %514 = vadd.xlane.f32.xlu0 %v488
        %v515 = vpop.xlane.xlu0 %514
        %516 = vadd.xlane.f32.xlu0 %v493
        %v517 = vpop.xlane.xlu0 %516
        %518 = vadd.xlane.f32.xlu0 %v498
        %v519 = vpop.xlane.xlu0 %518
        %520 = vadd.xlane.f32.xlu0 %v503
        %v521 = vpop.xlane.xlu0 %520
        %v522 = vrcp.pop 128.0
        %v523 = vmul.f32 %v507, %v522
        %v524 = vmul.f32 %v509, %v522
        %v525 = vmul.f32 %v511, %v522
        %v526 = vmul.f32 %v513, %v522
        %v527 = vmul.f32 %v515, %v522
        %v528 = vmul.f32 %v517, %v522
        %v529 = vmul.f32 %v519, %v522
        %v530 = vmul.f32 %v521, %v522
        %v531 = vsub.f32 %v468, %v523
        %v532 = vsub.f32 %v473, %v524
        %v533 = vsub.f32 %v478, %v525
        %v534 = vsub.f32 %v483, %v526
        %v535 = vsub.f32 %v488, %v527
        %v536 = vsub.f32 %v493, %v528
        %v537 = vsub.f32 %v498, %v529
        %v538 = vsub.f32 %v503, %v530
        %v539 = vmul.f32 %v531, %v531
        %v540 = vmul.f32 %v532, %v532
        %v541 = vmul.f32 %v533, %v533
        %v542 = vmul.f32 %v534, %v534
        %v543 = vmul.f32 %v535, %v535
        %v544 = vmul.f32 %v536, %v536
        %v545 = vmul.f32 %v537, %v537
        %v546 = vmul.f32 %v538, %v538
        %547 = vadd.xlane.f32.xlu0 %v539
        %v548 = vpop.xlane.xlu0 %547
        %549 = vadd.xlane.f32.xlu0 %v540
        %v550 = vpop.xlane.xlu0 %549
        %551 = vadd.xlane.f32.xlu0 %v541
        %v552 = vpop.xlane.xlu0 %551
        %553 = vadd.xlane.f32.xlu0 %v542
        %v554 = vpop.xlane.xlu0 %553
        %555 = vadd.xlane.f32.xlu0 %v543
        %v556 = vpop.xlane.xlu0 %555
        %557 = vadd.xlane.f32.xlu0 %v544
        %v558 = vpop.xlane.xlu0 %557
        %559 = vadd.xlane.f32.xlu0 %v545
        %v560 = vpop.xlane.xlu0 %559
        %561 = vadd.xlane.f32.xlu0 %v546
        %v562 = vpop.xlane.xlu0 %561
        %v563 = vmul.f32 %v548, %v522
        %v564 = vmul.f32 %v550, %v522
        %v565 = vmul.f32 %v552, %v522
        %v566 = vmul.f32 %v554, %v522
        %v567 = vmul.f32 %v556, %v522
        %v568 = vmul.f32 %v558, %v522
        %v569 = vmul.f32 %v560, %v522
        %v570 = vmul.f32 %v562, %v522
        %v571 = vadd.f32 %v563, 1e-05
        %v572 = vadd.f32 %v564, 1e-05
        %v573 = vadd.f32 %v565, 1e-05
        %v574 = vadd.f32 %v566, 1e-05
        %v575 = vadd.f32 %v567, 1e-05
        %v576 = vadd.f32 %v568, 1e-05
        %v577 = vadd.f32 %v569, 1e-05
        %v578 = vadd.f32 %v570, 1e-05
        %v579 = vrsqrt.pop %v571
        %v580 = vrsqrt.pop %v572
        %v581 = vrsqrt.pop %v573
        %v582 = vrsqrt.pop %v574
        %v583 = vrsqrt.pop %v575
        %v584 = vrsqrt.pop %v576
        %v585 = vrsqrt.pop %v577
        %v586 = vrsqrt.pop %v578
        %v587 = vmul.f32 %v531, %v579
        %v588 = vmul.f32 %v532, %v580
        %v589 = vmul.f32 %v533, %v581
        %v590 = vmul.f32 %v534, %v582
        %v591 = vmul.f32 %v535, %v583
        %v592 = vmul.f32 %v536, %v584
        %v593 = vmul.f32 %v537, %v585
        %v594 = vmul.f32 %v538, %v586
        %v595 = vld [vmem:[%s2] sm:$0x1]
        %v596 = vlaneseq
        %v597 = vshrl.u32 %v596, 7
        %v598 = vsub.s32 0, %v597
        %v599 = vrot.slane %v595, %v598
        %v600 = vmul.f32 %v587, %v599
        %v601 = vmul.f32 %v588, %v599
        %v602 = vmul.f32 %v589, %v599
        %v603 = vmul.f32 %v590, %v599
        %v604 = vmul.f32 %v591, %v599
        %v605 = vmul.f32 %v592, %v599
        %v606 = vmul.f32 %v593, %v599
        %v607 = vmul.f32 %v594, %v599
        %v608 = vld [vmem:[%s2 + $0x1] sm:$0x1]
        %v609 = vlaneseq
        %v610 = vshrl.u32 %v609, 7
        %v611 = vsub.s32 0, %v610
        %v612 = vrot.slane %v608, %v611
        %v613 = vadd.f32 %v600, %v612
        %v614 = vadd.f32 %v601, %v612
        %v615 = vadd.f32 %v602, %v612
        %v616 = vadd.f32 %v603, %v612
        %v617 = vadd.f32 %v604, %v612
        %v618 = vadd.f32 %v605, %v612
        %v619 = vadd.f32 %v606, %v612
        %v620 = vadd.f32 %v607, %v612
        %621 = vst [vmem:[%s188] sm:$0xff] %v613
        %s622 = scalar_lea.vmem %s188, 8 [#allocation4]
        %623 = vst [vmem:[%s622] sm:$0xff] %v614
        %s624 = scalar_lea.vmem %s188, 16 [#allocation4]
        %625 = vst [vmem:[%s624] sm:$0xff] %v615
        %s626 = scalar_lea.vmem %s188, 24 [#allocation4]
        %627 = vst [vmem:[%s626] sm:$0xff] %v616
        %s628 = scalar_lea.vmem %s188, 32 [#allocation4]
        %629 = vst [vmem:[%s628] sm:$0xff] %v617
        %s630 = scalar_lea.vmem %s188, 40 [#allocation4]
        %631 = vst [vmem:[%s630] sm:$0xff] %v618
        %s632 = scalar_lea.vmem %s188, 48 [#allocation4]
        %633 = vst [vmem:[%s632] sm:$0xff] %v619
        %s634 = scalar_lea.vmem %s188, 56 [#allocation4]
        %635 = vst [vmem:[%s634] sm:$0xff] %v620
        %s636 = sand.u32 %s109, 1
        %s637 = scalar_lea.sflag [#allocation5], %s636
        %s638 = sand.u32 %s109, 1
        %s639 = smul.addr %s638, 64
        %s640 = scalar_lea.vmem [#allocation4], %s639
        // Predicated region
        $region33: #{patch_merging.1} parent=31 // pred_check
          %p641 = pneg %p119
        $region34: #{patch_merging.1} parent=31 // pred_check_branch
          %643 = sbr.rel (%p641) target = $region36
        $region35: #{patch_merging.1} parent=31 // pred_region
          %s644 = smul.u32 8, %s22
          %s646 = ssub.s32 1024, 1024
          %647 = vsyncadd %s637, %s646
          %s648 = smul.addr %s21, 8
          %s649 = sadd.s32 %s644, %s648
          %s650 = smul.addr %s649, 128
          %s651 = scalar_lea.hbm %s3, %s650
          %s652 = sshll.u32 %s640, 4
          %s653 = int_to_ptr.vmem [resolvable:$true] %s652
          %658 = dma.vmem_to_hbm [thread:$0]  %s653, 1024, %s651, %s637, 128, 128, 8
        $region36: #{patch_merging.1} parent=31 // pred_fallthru
          _
      $region32: #{patch_merging.1} parent=5 // pred_fallthru
        _
      %p659 = scmp.le.s32.totalorder 2, %s12
      // Predicated region
      $region37: #{patch_merging.1} parent=5 // pred_check
        %p660 = pneg %p659
      $region38: #{patch_merging.1} parent=5 // pred_check_branch
        %662 = sbr.rel (%p660) target = $region40
      $region39: #{patch_merging.1} parent=5 // pred_region
        %s663 = ssub.s32 %s12, 2
        // Predicated region
        $region41: #{patch_merging.1} parent=39 // pred_check
          %p664 = pneg %p125
        $region42: #{patch_merging.1} parent=39 // pred_check_branch
          %666 = sbr.rel (%p664) target = $region44
        $region43: #{patch_merging.1} parent=39 // pred_region
          %s667 = sand.u32 %s110, 1
          %s668 = scalar_lea.sflag [#allocation5], %s667
          %s669 = sand.u32 %s110, 1
          %s670 = smul.addr %s669, 64
          %s671 = scalar_lea.vmem [#allocation4], %s670
          %672 = dma.done %s668, 1024
        $region44: #{patch_merging.1} parent=39 // pred_fallthru
          _
      $region40: #{patch_merging.1} parent=5 // pred_fallthru
        _
    $region6: #{patch_merging.1} parent=1 // loop_footer
      %s16 = sadd.s32 1, %s12
    $region7: #{patch_merging.1} parent=1 // loop_footer_branch
      %11 = sbr.rel target = $region3
    $region8: #{patch_merging.1} parent=1 // loop_exit
      _
    %673 = vsyncpa [#allocation5], 1
    %s674 = scalar_lea.sflag [#allocation5], 1
    %675 = vsyncpa %s674, 1

</llo_original>
